<compile_context>
chip_gen: v5e
topology: v5e:2x2
jax: 0.10.0
libtpu: 0.0.40
codegen_flags: <defaults>
</compile_context>

<pallas_src>
import jax
import jax.numpy as jnp
from jax.experimental import pallas as pl
from jax.experimental.pallas import tpu as pltpu


def _round_up(x: int, m: int) -> int:
    return ((x + m - 1) // m) * m


def _vmem_budget_bytes() -> int:
    """~85% of physical per-core VMEM; conservative 64 MiB (v7x) fallback."""
    cap = 64 * 1024 * 1024
    try:
        cap = int(getattr(pltpu.get_tpu_info(), "vmem_capacity_bytes", cap))
    except Exception:
        pass
    return int(cap * 0.85)


# --------------------------------------------------------------------------
# Kernels
# --------------------------------------------------------------------------
def _ffn_stream_kernel(x_ref, w1_ref, b1_ref, w2_ref, b2_ref, o_ref,
                       acc_ref=None):
    """Streaming schedule: grid = (row tiles, d_ff tiles), reduction innermost.

    The output block index (i, 0) is constant across k, so when the output
    dtype is f32 we accumulate directly into o_ref (acc_ref is omitted).
    """
    acc = o_ref if acc_ref is None else acc_ref
    k = pl.program_id(1)

    @pl.when(k == 0)
    def _():
        acc[...] = jnp.zeros_like(acc)

    # (tm, dm) @ (dm, tk) -> f32 on the MXU.
    h = jnp.dot(x_ref[...], w1_ref[...], preferred_element_type=jnp.float32)
    # bias + relu on the f32 accumulator (VPU); b1 tile (1, tk) broadcasts.
    h = jnp.maximum(h + b1_ref[...], 0.0)
    # dropout: identity in eval mode.
    acc[...] += jnp.dot(h.astype(w2_ref.dtype), w2_ref[...],
                        preferred_element_type=jnp.float32)

    @pl.when(k == pl.num_programs(1) - 1)
    def _():
        o_ref[...] = (acc[...] + b2_ref[...]).astype(o_ref.dtype)


def _make_resident_kernel(tk: int, n_chunks: int):
    """Resident schedule: grid = (row tiles,); weights stay in VMEM all call."""
    def kernel(x_ref, w1_ref, b1_ref, w2_ref, b2_ref, o_ref, acc_ref=None):
        acc = o_ref if acc_ref is None else acc_ref
        for c in range(n_chunks):  # static unroll; chunk count is small
            lo = c * tk
            h = jnp.dot(x_ref[...], w1_ref[:, lo:lo + tk],
                        preferred_element_type=jnp.float32)
            h = jnp.maximum(h + b1_ref[:, lo:lo + tk], 0.0)
            # dropout: identity in eval mode.
            y = jnp.dot(h.astype(w2_ref.dtype), w2_ref[lo:lo + tk, :],
                        preferred_element_type=jnp.float32)
            if c == 0:
                acc[...] = y
            else:
                acc[...] += y
        o_ref[...] = (acc[...] + b2_ref[...]).astype(o_ref.dtype)
    return kernel


# --------------------------------------------------------------------------
# Parameter preparation (hoisted out of the per-call path)
# --------------------------------------------------------------------------
def prepare_ffn_params(w1, b1, w2, b2, *, compute_dtype=jnp.bfloat16):
    """Pad to lane-aligned shapes and cast once at parameter-load time.

    w1: (d_model, d_ff), w2: (d_ff, d_model)  (transposed vs. torch Linear.weight),
    b1: (d_ff,) or (1, d_ff), b2: (d_model,) or (1, d_model).
    """
    d_model, d_ff = w1.shape
    dm_p = _round_up(d_model, 128)
    dff_p = _round_up(d_ff, 128)
    b1 = jnp.asarray(b1).reshape(1, -1).astype(jnp.float32)
    b2 = jnp.asarray(b2).reshape(1, -1).astype(jnp.float32)
    if dm_p == d_model and dff_p == d_ff:
        w1_p = w1.astype(compute_dtype)
        w2_p = w2.astype(compute_dtype)
        b1_p, b2_p = b1, b2
    else:
        w1_p = jnp.zeros((dm_p, dff_p), compute_dtype).at[:d_model, :d_ff].set(
            w1.astype(compute_dtype))
        w2_p = jnp.zeros((dff_p, dm_p), compute_dtype).at[:d_ff, :d_model].set(
            w2.astype(compute_dtype))
        b1_p = jnp.zeros((1, dff_p), jnp.float32).at[:, :d_ff].set(b1)
        b2_p = jnp.zeros((1, dm_p), jnp.float32).at[:, :d_model].set(b2)
    return {"w1": w1_p, "b1": b1_p, "w2": w2_p, "b2": b2_p,
            "d_model": d_model, "d_ff": d_ff}


# --------------------------------------------------------------------------
# Forward wrapper
# --------------------------------------------------------------------------
def positionwise_feed_forward(x, params, *, tm=512, tk=512,
                              resident_weights=None):
    """x: (..., d_model). Returns same shape/dtype as x."""
    w1_p, b1_p = params["w1"], params["b1"]
    w2_p, b2_p = params["w2"], params["b2"]
    d_model, d_ff = params["d_model"], params["d_ff"]
    dm_p, dff_p = w1_p.shape
    cdt = w1_p.dtype                       # compute dtype (bf16)
    out_dtype = x.dtype
    out_isz = jnp.dtype(out_dtype).itemsize
    acc_needed = out_dtype != jnp.float32  # f32 output accumulates in o_ref

    lead = x.shape[:-1]
    n = 1
    for s in lead:
        n *= s
    x2d = x.reshape(n, d_model)

    # Reduction tile: largest multiple of 128 that divides dff_p, <= tk.
    tk = max(128, min(_round_up(tk, 128), dff_p))
    while dff_p % tk != 0:
        tk -= 128

    # Row tile: multiple of 8, clamped to n; keep >=2 row tiles when possible
    # so the "parallel" axis actually splits across v7x's two TensorCores.
    tm = max(8, min(_round_up(tm, 8), _round_up(n, 8)))
    if n > 8 and _round_up(n, tm) == tm:
        tm = _round_up((n + 1) // 2, 8)

    budget = _vmem_budget_bytes()
    w_bytes = (w1_p.size + w2_p.size) * w1_p.dtype.itemsize
    b_bytes = (b1_p.size + b2_p.size) * 4

    def _io_bytes(tm_):
        acc = tm_ * dm_p * 4 if acc_needed else 0
        return 2 * tm_ * dm_p * (cdt.itemsize + out_isz) + acc

    def _resident_fit(tm_):
        # Budget weights as if double-buffered, plus margin for internal scratch.
        return 2 * (w_bytes + b_bytes) + _io_bytes(tm_) + (4 << 20) <= budget

    def _stream_fit(tm_):
        wtile = 2 * (dm_p * tk + tk * dm_p) * cdt.itemsize + 2 * (tk + dm_p) * 4
        h_spill = tm_ * tk * 4  # the (tm, tk) f32 hidden tile spills to VMEM
        return wtile + _io_bytes(tm_) + h_spill + (2 << 20) <= budget

    if resident_weights is None:
        resident_weights = _resident_fit(tm)

    fit = _resident_fit if resident_weights else _stream_fit
    while tm > 8 and not fit(tm):
        tm = max(8, _round_up(tm // 2, 8))

    n_p = _round_up(n, tm)
    grid_rows = n_p // tm

    # Pad x only when actually required (zero padding is exact for this FFN).
    if n_p != n or dm_p != d_model:
        x_b = jnp.zeros((n_p, dm_p), cdt).at[:n, :d_model].set(x2d.astype(cdt))
    else:
        x_b = x2d.astype(cdt)

    flops = 4 * n_p * dm_p * dff_p  # two matmuls, 2 flops / MAC
    scratch = [] if not acc_needed else [pltpu.VMEM((tm, dm_p), jnp.float32)]
    out_shape = jax.ShapeDtypeStruct((n_p, dm_p), out_dtype)

    if resident_weights:
        kernel = _make_resident_kernel(tk, dff_p // tk)
        grid_spec = pltpu.PrefetchScalarGridSpec(
            num_scalar_prefetch=0,
            grid=(grid_rows,),
            in_specs=[
                pl.BlockSpec((tm, dm_p), lambda i: (i, 0)),
                # Constant block index -> weights/biases DMA'd once per call.
                pl.BlockSpec((dm_p, dff_p), lambda i: (0, 0)),
                pl.BlockSpec((1, dff_p), lambda i: (0, 0)),
                pl.BlockSpec((dff_p, dm_p), lambda i: (0, 0)),
                pl.BlockSpec((1, dm_p), lambda i: (0, 0)),
            ],
            out_specs=pl.BlockSpec((tm, dm_p), lambda i: (i, 0)),
            scratch_shapes=scratch,
        )
        dims = ("parallel",)
        bytes_accessed = (x_b.size * cdt.itemsize + n_p * dm_p * out_isz
                          + w_bytes + b_bytes)
    else:
        kernel = _ffn_stream_kernel
        grid_spec = pltpu.PrefetchScalarGridSpec(
            num_scalar_prefetch=0,
            grid=(grid_rows, dff_p // tk),
            in_specs=[
                pl.BlockSpec((tm, dm_p), lambda i, k: (i, 0)),
                # k is innermost: W1/W2 are re-streamed once per ROW tile;
                # a large tm amortizes that traffic.
                pl.BlockSpec((dm_p, tk), lambda i, k: (0, k)),
                pl.BlockSpec((1, tk), lambda i, k: (0, k)),
                pl.BlockSpec((tk, dm_p), lambda i, k: (k, 0)),
                pl.BlockSpec((1, dm_p), lambda i, k: (0, 0)),
            ],
            out_specs=pl.BlockSpec((tm, dm_p), lambda i, k: (i, 0)),
            scratch_shapes=scratch,
        )
        dims = ("parallel", "arbitrary")
        # Weight traffic is multiplied by the number of row tiles.
        bytes_accessed = (x_b.size * cdt.itemsize + n_p * dm_p * out_isz
                          + grid_rows * (w_bytes + b_bytes))

    out2d = pl.pallas_call(
        kernel,
        out_shape=out_shape,
        grid_spec=grid_spec,
        compiler_params=pltpu.CompilerParams(
            dimension_semantics=dims,
            vmem_limit_bytes=budget,
        ),
        cost_estimate=pl.CostEstimate(
            flops=flops, transcendentals=0, bytes_accessed=int(bytes_accessed)),
    )(x_b, w1_p, b1_p, w2_p, b2_p)

    if n_p != n or dm_p != d_model:
        out2d = out2d[:n, :d_model]
    return out2d.reshape(*lead, d_model)


# --------------------------------------------------------------------------
# Demo / correctness check
# --------------------------------------------------------------------------
if __name__ == "__main__":
    batch, seq = 2, 8
    d_model, d_ff = 32, 64

    key = jax.random.PRNGKey(0)
    kx, kw1, kb1, kw2, kb2 = jax.random.split(key, 5)

    x = jax.random.normal(kx, (batch, seq, d_model), dtype=jnp.float32)

    # nn.Linear-style init; weights stored transposed (in, out) for x @ W.
    bound1 = 1.0 / jnp.sqrt(d_model)
    w1 = jax.random.uniform(kw1, (d_model, d_ff), jnp.float32, -bound1, bound1)
    b1 = jax.random.uniform(kb1, (d_ff,), jnp.float32, -bound1, bound1)
    bound2 = 1.0 / jnp.sqrt(d_ff)
    w2 = jax.random.uniform(kw2, (d_ff, d_model), jnp.float32, -bound2, bound2)
    b2 = jax.random.uniform(kb2, (d_model,), jnp.float32, -bound2, bound2)

    # Pad/cast weights ONCE, outside the per-call path.
    params = prepare_ffn_params(w1, b1, w2, b2)

    # Exercise both schedules plus the automatic selection.
    out_resident = positionwise_feed_forward(x, params, resident_weights=True)
    out_stream = positionwise_feed_forward(x, params, resident_weights=False)
    out_auto = positionwise_feed_forward(x, params)
    jax.block_until_ready((out_resident, out_stream, out_auto))

    # Reference matching the kernel's bf16-in / f32-accumulate numerics.
    x2d = x.reshape(-1, d_model)
    h_ref = jnp.dot(x2d.astype(jnp.bfloat16), w1.astype(jnp.bfloat16),
                    preferred_element_type=jnp.float32) + b1[None, :]
    h_ref = jnp.maximum(h_ref, 0.0)
    ref_bf16 = (jnp.dot(h_ref.astype(jnp.bfloat16), w2.astype(jnp.bfloat16),
                        preferred_element_type=jnp.float32) + b2[None, :]
                ).reshape(batch, seq, d_model)

    for out in (out_resident, out_stream, out_auto):
        assert out.shape == (batch, seq, d_model)
        assert jnp.allclose(out, ref_bf16, atol=2e-3, rtol=2e-3)

    # Loose sanity check against full-f32 math (bf16 quantization tolerance).
    ref_f32 = (jnp.maximum(x2d @ w1 + b1[None, :], 0.0) @ w2 + b2[None, :]
               ).reshape(batch, seq, d_model)
    assert jnp.allclose(out_resident, ref_f32, atol=5e-2, rtol=5e-2)

    print("KERNEL_OK")
</pallas_src>

<mosaic_0001>
module attributes {stable_mosaic.version = 11 : i64} {
  func.func @kernel(%arg0: i32, %arg1: memref<8x128xbf16, #tpu.memory_space<vmem>>, %arg2: memref<128x128xbf16, #tpu.memory_space<vmem>>, %arg3: memref<1x128xf32, #tpu.memory_space<vmem>>, %arg4: memref<128x128xbf16, #tpu.memory_space<vmem>>, %arg5: memref<1x128xf32, #tpu.memory_space<vmem>>, %arg6: memref<8x128xf32, #tpu.memory_space<vmem>>) attributes {dimension_semantics = [#tpu.dimension_semantics<parallel>], iteration_bounds = array<i64: 2>, scalar_prefetch = 0 : i64, scratch_operands = 0 : i64, tpu.core_type = #tpu.core_type<tc>, window_params = [{transform_indices = @transform_0, window_bounds = array<i64: 8, 128>}, {pipeline_mode = #tpu.pipeline_mode<synchronous>, transform_indices = @transform_1, window_bounds = array<i64: 128, 128>}, {pipeline_mode = #tpu.pipeline_mode<synchronous>, transform_indices = @transform_2, window_bounds = array<i64: 1, 128>}, {pipeline_mode = #tpu.pipeline_mode<synchronous>, transform_indices = @transform_3, window_bounds = array<i64: 128, 128>}, {pipeline_mode = #tpu.pipeline_mode<synchronous>, transform_indices = @transform_4, window_bounds = array<i64: 1, 128>}, {transform_indices = @transform_5, window_bounds = array<i64: 8, 128>}]} {
    %c0 = arith.constant 0 : index
    %c0_0 = arith.constant 0 : index
    %0 = vector.load %arg1[%c0, %c0_0] : memref<8x128xbf16, #tpu.memory_space<vmem>>, vector<8x128xbf16>
    %c0_1 = arith.constant 0 : index
    %c0_2 = arith.constant 0 : index
    %1 = vector.load %arg2[%c0_1, %c0_2] : memref<128x128xbf16, #tpu.memory_space<vmem>>, vector<128x128xbf16>
    %cst = arith.constant dense<0.000000e+00> : vector<8x128xf32>
    %2 = tpu.matmul %0, %1, %cst {dimension_numbers = #tpu.dot_dimension_numbers<[1], [0], [0], [1], [0, 0, 1, 1], [], []>} : vector<8x128xbf16>, vector<128x128xbf16>, vector<8x128xf32> -> vector<8x128xf32>
    %c0_3 = arith.constant 0 : index
    %c0_4 = arith.constant 0 : index
    %3 = vector.load %arg3[%c0_3, %c0_4] : memref<1x128xf32, #tpu.memory_space<vmem>>, vector<1x128xf32>
    %4 = vector.broadcast %3 : vector<1x128xf32> to vector<8x128xf32>
    %5 = arith.addf %2, %4 : vector<8x128xf32>
    %cst_5 = arith.constant 0.000000e+00 : f32
    %6 = vector.broadcast %cst_5 : f32 to vector<8x128xf32>
    %7 = arith.maximumf %5, %6 : vector<8x128xf32>
    %8 = arith.truncf %7 : vector<8x128xf32> to vector<8x128xbf16>
    %c0_6 = arith.constant 0 : index
    %c0_7 = arith.constant 0 : index
    %9 = vector.load %arg4[%c0_6, %c0_7] : memref<128x128xbf16, #tpu.memory_space<vmem>>, vector<128x128xbf16>
    %cst_8 = arith.constant dense<0.000000e+00> : vector<8x128xf32>
    %10 = tpu.matmul %8, %9, %cst_8 {dimension_numbers = #tpu.dot_dimension_numbers<[1], [0], [0], [1], [0, 0, 1, 1], [], []>} : vector<8x128xbf16>, vector<128x128xbf16>, vector<8x128xf32> -> vector<8x128xf32>
    %c0_9 = arith.constant 0 : index
    %c0_10 = arith.constant 0 : index
    %11 = vector.load %arg6[%c0_9, %c0_10] : memref<8x128xf32, #tpu.memory_space<vmem>>, vector<8x128xf32>
    tpu.vector_store %arg6[%c0_9, %c0_10], %10 {strides = array<i32>} : memref<8x128xf32, #tpu.memory_space<vmem>>, vector<8x128xf32>,
    %c0_11 = arith.constant 0 : index
    %c0_12 = arith.constant 0 : index
    %12 = vector.load %arg6[%c0_11, %c0_12] : memref<8x128xf32, #tpu.memory_space<vmem>>, vector<8x128xf32>
    %c0_13 = arith.constant 0 : index
    %c0_14 = arith.constant 0 : index
    %13 = vector.load %arg5[%c0_13, %c0_14] : memref<1x128xf32, #tpu.memory_space<vmem>>, vector<1x128xf32>
    %14 = vector.broadcast %13 : vector<1x128xf32> to vector<8x128xf32>
    %15 = arith.addf %12, %14 : vector<8x128xf32>
    %c0_15 = arith.constant 0 : index
    %c0_16 = arith.constant 0 : index
    %16 = vector.load %arg6[%c0_15, %c0_16] : memref<8x128xf32, #tpu.memory_space<vmem>>, vector<8x128xf32>
    tpu.vector_store %arg6[%c0_15, %c0_16], %15 {strides = array<i32>} : memref<8x128xf32, #tpu.memory_space<vmem>>, vector<8x128xf32>,
    return
  }
  func.func @transform_0(%arg0: i32) -> (i32, i32) {
    %c0_i32 = arith.constant 0 : i32
    %c0_i32_0 = arith.constant 0 : i32
    return %arg0, %c0_i32 : i32, i32
  }
  func.func @transform_1(%arg0: i32) -> (i32, i32) {
    %c0_i32 = arith.constant 0 : i32
    %c0_i32_0 = arith.constant 0 : i32
    %c0_i32_1 = arith.constant 0 : i32
    return %c0_i32, %c0_i32_0 : i32, i32
  }
  func.func @transform_2(%arg0: i32) -> (i32, i32) {
    %c0_i32 = arith.constant 0 : i32
    %c0_i32_0 = arith.constant 0 : i32
    %c0_i32_1 = arith.constant 0 : i32
    return %c0_i32, %c0_i32_0 : i32, i32
  }
  func.func @transform_3(%arg0: i32) -> (i32, i32) {
    %c0_i32 = arith.constant 0 : i32
    %c0_i32_0 = arith.constant 0 : i32
    %c0_i32_1 = arith.constant 0 : i32
    return %c0_i32, %c0_i32_0 : i32, i32
  }
  func.func @transform_4(%arg0: i32) -> (i32, i32) {
    %c0_i32 = arith.constant 0 : i32
    %c0_i32_0 = arith.constant 0 : i32
    %c0_i32_1 = arith.constant 0 : i32
    return %c0_i32, %c0_i32_0 : i32, i32
  }
  func.func @transform_5(%arg0: i32) -> (i32, i32) {
    %c0_i32 = arith.constant 0 : i32
    %c0_i32_0 = arith.constant 0 : i32
    return %arg0, %c0_i32 : i32, i32
  }
}

</mosaic_0001>

<llo_original>
// kernel: tpu_custom_call.1
$region0: #{tpu_custom_call.1}
  #allocation0 [shape = 'u32[]', space=smem, size = 0x4, offset = 0x4, fixed_abs, tag = 'smem constant byte address 0x4 - core index']
  #allocation1 [shape = 'u32[72,128]{1,0:T(1,128)}', space=vmem, size = 0x9000, scoped, tag = 'internal scratch']
  %s0 = inlined_call_operand.hbm [shape: bf16[16,128], index: 0, kind: input, shape index: {}]
  %s1 = inlined_call_operand.hbm [shape: bf16[128,128], index: 1, kind: input, shape index: {}]
  %s2 = inlined_call_operand.vmem [shape: f32[1,128], index: 2, kind: input, shape index: {}]
  %s3 = inlined_call_operand.hbm [shape: bf16[128,128], index: 3, kind: input, shape index: {}]
  %s4 = inlined_call_operand.vmem [shape: f32[1,128], index: 4, kind: input, shape index: {}]
  %s5 = inlined_call_operand.hbm [shape: f32[16,128], index: 5, kind: output, shape index: {}]
  %s6 = sld [smem:[#allocation0]]
  $region65: #{tpu_custom_call.1} parent=0
    _
  %s8 = ssub.s32 1, %s6
  %s9 = scalar_select 0, %s8, %s6
  $region1: #{tpu_custom_call.1} parent=0
    #allocation2 [shape = 'u8[4096]{0}', space=vmem, size = 0x1000, scoped, tag = 'input window, operand 0']
    #allocation3 [shape = 's32[2]{0}', space=sflag, size = 0x8, scoped, tag = 'scoped memory for tpu_custom_call.1']
    #allocation4 [shape = 's32[2]{0}', space=sflag, size = 0x8, scoped, tag = 'scoped memory for tpu_custom_call.1']
    #allocation5 [shape = 'u8[32768]{0}', space=vmem, size = 0x8000, scoped, tag = 'input window, operand 1, single buffered']
    #allocation6 [shape = 's32[1]{0}', space=sflag, size = 0x4, scoped, tag = 'scoped memory for tpu_custom_call.1']
    #allocation7 [shape = 'u8[32768]{0}', space=vmem, size = 0x8000, scoped, tag = 'input window, operand 3, single buffered']
    #allocation8 [shape = 'u8[8192]{0}', space=vmem, size = 0x2000, scoped, tag = 'output window, operand 0']
    %10 = vsyncpa [#allocation3], 0
    %s11 = scalar_lea.sflag [#allocation3], 1
    %12 = vsyncpa %s11, 0
    %13 = vsyncpa [#allocation6], 0
    %14 = vsyncpa [#allocation4], 0
    %s15 = scalar_lea.sflag [#allocation4], 1
    %16 = vsyncpa %s15, 0
    loop: start=0, step=1, limit=4
    $region2: #{tpu_custom_call.1} parent=1 // loop_pre_header
      _
    $region3: #{tpu_custom_call.1} parent=1 // loop_header
      %s18 = sphi 0, %s22
      %p19 = scmp.ge.s32.totalorder %s18, 4
      %s28 = sphi 0, %s30
      %s31 = sphi 0, %s28
      %s32 = sphi 0, %s31
      %s48 = sphi 0, %s32
      %s52 = sphi 0, %s52
      %s54 = sphi 0, %s52
      %s55 = sphi 0, %s54
      %s69 = sphi 0, %s55
      %s73 = sphi 0, %s73
      %s75 = sphi 0, %s73
      %s76 = sphi 0, %s75
      %s90 = sphi 0, %s76
      %s94 = sphi 0, %s94
      %s96 = sphi 0, %s94
      %s97 = sphi 0, %s96
      %s111 = sphi 0, %s97
      %s115 = sphi 0, %s115
      %s117 = sphi 0, %s115
      %s118 = sphi 0, %s117
      %s132 = sphi 0, %s118
      %s138 = sphi 0, %s140
      %s141 = sphi 0, %s138
      %s142 = sphi 0, %s141
      %s158 = sphi 0, %s142
    $region4: #{tpu_custom_call.1} parent=1 // loop_header_branch
      %21 = sbr.rel (%p19) target = $region8
    $region5: #{tpu_custom_call.1} parent=1 // loop_body
      %s23 = ssub.s32 %s18, 1
      %s24 = ssub.s32 %s18, 2
      %s25 = sadd.s32 %s18, 1
      %s26 = ssub.s32 %s18, %s25
      %p27 = scmp.eq.s32.totalorder %s26, 0
      %s29 = sadd.s32 %s28, 1
      %s30 = scalar_select %p27, %s28, %s29
      %p33 = pneg %p27
      %p34 = scmp.eq.s32.totalorder %s18, 1
      %p35 = por %p33, %p34
      %p36 = scmp.ne.s32.totalorder %s28, %s31
      %p37 = scmp.eq.s32.totalorder %s18, 0
      %p38 = por %p36, %p37
      %p39 = scmp.ne.s32.totalorder %s28, %s31
      %p40 = scmp.eq.s32.totalorder %s23, 1
      %p41 = por %p39, %p40
      %p42 = scmp.ne.s32.totalorder %s31, %s32
      %p43 = scmp.eq.s32.totalorder %s23, 0
      %p44 = por %p42, %p43
      %p45 = scmp.ne.s32.totalorder %s31, %s32
      %p46 = scmp.eq.s32.totalorder %s24, 1
      %p47 = por %p45, %p46
      %p49 = scmp.ne.s32.totalorder %s32, %s48
      %p50 = scmp.eq.s32.totalorder %s24, 0
      %p51 = por %p49, %p50
      %s53 = sadd.s32 %s52, 1
      %p56 = scmp.eq.s32.totalorder %s18, 1
      %p57 = scmp.ne.s32.totalorder %s52, %s54
      %p58 = scmp.eq.s32.totalorder %s18, 0
      %p59 = por %p57, %p58
      %p60 = scmp.ne.s32.totalorder %s52, %s54
      %p61 = scmp.eq.s32.totalorder %s23, 1
      %p62 = por %p60, %p61
      %p63 = scmp.ne.s32.totalorder %s54, %s55
      %p64 = scmp.eq.s32.totalorder %s23, 0
      %p65 = por %p63, %p64
      %p66 = scmp.ne.s32.totalorder %s54, %s55
      %p67 = scmp.eq.s32.totalorder %s24, 1
      %p68 = por %p66, %p67
      %p70 = scmp.ne.s32.totalorder %s55, %s69
      %p71 = scmp.eq.s32.totalorder %s24, 0
      %p72 = por %p70, %p71
      %s74 = sadd.s32 %s73, 1
      %p77 = scmp.eq.s32.totalorder %s18, 1
      %p78 = scmp.ne.s32.totalorder %s73, %s75
      %p79 = scmp.eq.s32.totalorder %s18, 0
      %p80 = por %p78, %p79
      %p81 = scmp.ne.s32.totalorder %s73, %s75
      %p82 = scmp.eq.s32.totalorder %s23, 1
      %p83 = por %p81, %p82
      %p84 = scmp.ne.s32.totalorder %s75, %s76
      %p85 = scmp.eq.s32.totalorder %s23, 0
      %p86 = por %p84, %p85
      %p87 = scmp.ne.s32.totalorder %s75, %s76
      %p88 = scmp.eq.s32.totalorder %s24, 1
      %p89 = por %p87, %p88
      %p91 = scmp.ne.s32.totalorder %s76, %s90
      %p92 = scmp.eq.s32.totalorder %s24, 0
      %p93 = por %p91, %p92
      %s95 = sadd.s32 %s94, 1
      %p98 = scmp.eq.s32.totalorder %s18, 1
      %p99 = scmp.ne.s32.totalorder %s94, %s96
      %p100 = scmp.eq.s32.totalorder %s18, 0
      %p101 = por %p99, %p100
      %p102 = scmp.ne.s32.totalorder %s94, %s96
      %p103 = scmp.eq.s32.totalorder %s23, 1
      %p104 = por %p102, %p103
      %p105 = scmp.ne.s32.totalorder %s96, %s97
      %p106 = scmp.eq.s32.totalorder %s23, 0
      %p107 = por %p105, %p106
      %p108 = scmp.ne.s32.totalorder %s96, %s97
      %p109 = scmp.eq.s32.totalorder %s24, 1
      %p110 = por %p108, %p109
      %p112 = scmp.ne.s32.totalorder %s97, %s111
      %p113 = scmp.eq.s32.totalorder %s24, 0
      %p114 = por %p112, %p113
      %s116 = sadd.s32 %s115, 1
      %p119 = scmp.eq.s32.totalorder %s18, 1
      %p120 = scmp.ne.s32.totalorder %s115, %s117
      %p121 = scmp.eq.s32.totalorder %s18, 0
      %p122 = por %p120, %p121
      %p123 = scmp.ne.s32.totalorder %s115, %s117
      %p124 = scmp.eq.s32.totalorder %s23, 1
      %p125 = por %p123, %p124
      %p126 = scmp.ne.s32.totalorder %s117, %s118
      %p127 = scmp.eq.s32.totalorder %s23, 0
      %p128 = por %p126, %p127
      %p129 = scmp.ne.s32.totalorder %s117, %s118
      %p130 = scmp.eq.s32.totalorder %s24, 1
      %p131 = por %p129, %p130
      %p133 = scmp.ne.s32.totalorder %s118, %s132
      %p134 = scmp.eq.s32.totalorder %s24, 0
      %p135 = por %p133, %p134
      %s136 = ssub.s32 %s18, %s25
      %p137 = scmp.eq.s32.totalorder %s136, 0
      %s139 = sadd.s32 %s138, 1
      %s140 = scalar_select %p137, %s138, %s139
      %p143 = pneg %p137
      %p144 = scmp.eq.s32.totalorder %s18, 1
      %p145 = por %p143, %p144
      %p146 = scmp.ne.s32.totalorder %s138, %s141
      %p147 = scmp.eq.s32.totalorder %s18, 0
      %p148 = por %p146, %p147
      %p149 = scmp.ne.s32.totalorder %s138, %s141
      %p150 = scmp.eq.s32.totalorder %s23, 1
      %p151 = por %p149, %p150
      %p152 = scmp.ne.s32.totalorder %s141, %s142
      %p153 = scmp.eq.s32.totalorder %s23, 0
      %p154 = por %p152, %p153
      %p155 = scmp.ne.s32.totalorder %s141, %s142
      %p156 = scmp.eq.s32.totalorder %s24, 1
      %p157 = por %p155, %p156
      %p159 = scmp.ne.s32.totalorder %s142, %s158
      %p160 = scmp.eq.s32.totalorder %s24, 0
      %p161 = por %p159, %p160
      %p162 = scmp.le.s32.totalorder 1, %s18
      %p163 = scmp.lt.s32.totalorder %s18, 3
      %p164 = pnand %p162, %p163
      %p165 = pneg %p164
      // Predicated region
      $region9: #{tpu_custom_call.1} parent=5 // pred_check
        _
      $region10: #{tpu_custom_call.1} parent=5 // pred_check_branch
        %167 = sbr.rel (%p164) target = $region12
      $region11: #{tpu_custom_call.1} parent=5 // pred_region
        %s168 = ssub.s32 %s18, 1
        // Predicated region
        $region13: #{tpu_custom_call.1} parent=11 // pred_check
          %p169 = pneg %p65
        $region14: #{tpu_custom_call.1} parent=11 // pred_check_branch
          %171 = sbr.rel (%p169) target = $region16
        $region15: #{tpu_custom_call.1} parent=11 // pred_region
          %173 = vsyncadd [#allocation6], 0
          %s174 = sshll.u32 %s1, 4
          %s175 = int_to_ptr.hbm [resolvable:$true] %s174
          %s176 = sshll.u32 [#allocation5], 4
          %s177 = int_to_ptr.vmem [resolvable:$true] %s176
          %182 = dma.hbm_to_vmem [thread:$0]  %s175, 1024, %s177, [#allocation6], 64, 64, 4
        $region16: #{tpu_custom_call.1} parent=11 // pred_fallthru
          _
        // Predicated region
        $region17: #{tpu_custom_call.1} parent=11 // pred_check
          %p183 = pneg %p86
        $region18: #{tpu_custom_call.1} parent=11 // pred_check_branch
          %185 = sbr.rel (%p183) target = $region20
        $region19: #{tpu_custom_call.1} parent=11 // pred_region
          _
        $region20: #{tpu_custom_call.1} parent=11 // pred_fallthru
          _
        // Predicated region
        $region21: #{tpu_custom_call.1} parent=11 // pred_check
          %p186 = pneg %p107
        $region22: #{tpu_custom_call.1} parent=11 // pred_check_branch
          %188 = sbr.rel (%p186) target = $region24
        $region23: #{tpu_custom_call.1} parent=11 // pred_region
          %190 = vsyncadd [#allocation6], 0
          %s191 = sshll.u32 %s3, 4
          %s192 = int_to_ptr.hbm [resolvable:$true] %s191
          %s193 = sshll.u32 [#allocation7], 4
          %s194 = int_to_ptr.vmem [resolvable:$true] %s193
          %199 = dma.hbm_to_vmem [thread:$0]  %s192, 1024, %s194, [#allocation6], 64, 64, 4
        $region24: #{tpu_custom_call.1} parent=11 // pred_fallthru
          _
        // Predicated region
        $region25: #{tpu_custom_call.1} parent=11 // pred_check
          %p200 = pneg %p128
        $region26: #{tpu_custom_call.1} parent=11 // pred_check_branch
          %202 = sbr.rel (%p200) target = $region28
        $region27: #{tpu_custom_call.1} parent=11 // pred_region
          _
        $region28: #{tpu_custom_call.1} parent=11 // pred_fallthru
          _
      $region12: #{tpu_custom_call.1} parent=5 // pred_fallthru
        _
      %p203 = scmp.lt.s32.totalorder %s18, 2
      // Predicated region
      $region29: #{tpu_custom_call.1} parent=5 // pred_check
        %p204 = pneg %p203
      $region30: #{tpu_custom_call.1} parent=5 // pred_check_branch
        %206 = sbr.rel (%p204) target = $region32
      $region31: #{tpu_custom_call.1} parent=5 // pred_region
        // Predicated region
        $region33: #{tpu_custom_call.1} parent=31 // pred_check
          %p207 = pneg %p38
        $region34: #{tpu_custom_call.1} parent=31 // pred_check_branch
          %209 = sbr.rel (%p207) target = $region36
        $region35: #{tpu_custom_call.1} parent=31 // pred_region
          %s210 = sand.u32 %s28, 1
          %s211 = scalar_lea.sflag [#allocation3], %s210
          %s212 = sand.u32 %s28, 1
          %s213 = smul.addr %s212, 4
          %s214 = scalar_lea.vmem [#allocation2], %s213
          %216 = vsyncadd %s211, 0
          %s217 = smul.addr %s18, 4
          %s218 = scalar_lea.hbm %s0, %s217
          %s220 = sshll.u32 %s218, 4
          %s221 = int_to_ptr.hbm [resolvable:$true] %s220
          %s222 = sshll.u32 %s214, 4
          %s223 = int_to_ptr.vmem [resolvable:$true] %s222
          %225 = dma.hbm_to_vmem [thread:$0]  %s221, 64, %s223, %s211
        $region36: #{tpu_custom_call.1} parent=31 // pred_fallthru
          _
      $region32: #{tpu_custom_call.1} parent=5 // pred_fallthru
        _
      %p226 = scmp.le.s32.totalorder 1, %s18
      %p227 = scmp.lt.s32.totalorder %s18, 3
      %p228 = pnand %p226, %p227
      %p229 = pneg %p228
      // Predicated region
      $region37: #{tpu_custom_call.1} parent=5 // pred_check
        _
      $region38: #{tpu_custom_call.1} parent=5 // pred_check_branch
        %231 = sbr.rel (%p228) target = $region40
      $region39: #{tpu_custom_call.1} parent=5 // pred_region
        %s232 = ssub.s32 %s18, 1
        %s233 = sand.u32 %s31, 1
        %s234 = scalar_lea.sflag [#allocation3], %s233
        %s235 = sand.u32 %s31, 1
        %s236 = smul.addr %s235, 4
        %s237 = scalar_lea.vmem [#allocation2], %s236
        // Predicated region
        $region41: #{tpu_custom_call.1} parent=39 // pred_check
          %p238 = pneg %p44
        $region42: #{tpu_custom_call.1} parent=39 // pred_check_branch
          %240 = sbr.rel (%p238) target = $region44
        $region43: #{tpu_custom_call.1} parent=39 // pred_region
          %242 = dma.done %s234, 64
        $region44: #{tpu_custom_call.1} parent=39 // pred_fallthru
          _
        // Predicated region
        $region45: #{tpu_custom_call.1} parent=39 // pred_check
          %p243 = pneg %p65
        $region46: #{tpu_custom_call.1} parent=39 // pred_check_branch
          %245 = sbr.rel (%p243) target = $region48
        $region47: #{tpu_custom_call.1} parent=39 // pred_region
          %247 = dma.done [#allocation6], 1024
        $region48: #{tpu_custom_call.1} parent=39 // pred_fallthru
          _
        // Predicated region
        $region49: #{tpu_custom_call.1} parent=39 // pred_check
          %p248 = pneg %p107
        $region50: #{tpu_custom_call.1} parent=39 // pred_check_branch
          %250 = sbr.rel (%p248) target = $region52
        $region51: #{tpu_custom_call.1} parent=39 // pred_region
          %252 = dma.done [#allocation6], 1024
        $region52: #{tpu_custom_call.1} parent=39 // pred_fallthru
          _
        %s253 = sand.u32 %s31, 1
        %s254 = scalar_lea.sflag [#allocation3], %s253
        %s255 = sand.u32 %s31, 1
        %s256 = smul.addr %s255, 4
        %s257 = scalar_lea.vmem [#allocation2], %s256
        %p258 = pneg %p44
        %p259 = pneg %p41
        %p260 = pneg %p65
        %p261 = pneg %p62
        %p262 = pneg %p86
        %p263 = pneg %p83
        %p264 = pneg %p107
        %p265 = pneg %p104
        %p266 = pneg %p128
        %p267 = pneg %p125
        %p268 = pneg %p154
        %p269 = pneg %p151
        %s270 = sand.u32 %s141, 1
        %s271 = scalar_lea.sflag [#allocation4], %s270
        %s272 = sand.u32 %s141, 1
        %s273 = smul.addr %s272, 8
        %s274 = scalar_lea.vmem [#allocation8], %s273
        %v275 = vld [vmem:[%s237] sm:$0xf]
        %v276 = vld [vmem:[#allocation5] sm:$0xf]
        %v277 = vld [vmem:[#allocation5 + $0x4] sm:$0xf]
        %v278 = vld [vmem:[#allocation5 + $0x8] sm:$0xf]
        %v279 = vld [vmem:[#allocation5 + $0xc] sm:$0xf]
        %v280 = vld [vmem:[#allocation5 + $0x10] sm:$0xf]
        %v281 = vld [vmem:[#allocation5 + $0x14] sm:$0xf]
        %v282 = vld [vmem:[#allocation5 + $0x18] sm:$0xf]
        %v283 = vld [vmem:[#allocation5 + $0x1c] sm:$0xf]
        %v284 = vld [vmem:[#allocation5 + $0x20] sm:$0xf]
        %v285 = vld [vmem:[#allocation5 + $0x24] sm:$0xf]
        %v286 = vld [vmem:[#allocation5 + $0x28] sm:$0xf]
        %v287 = vld [vmem:[#allocation5 + $0x2c] sm:$0xf]
        %v288 = vld [vmem:[#allocation5 + $0x30] sm:$0xf]
        %v289 = vld [vmem:[#allocation5 + $0x34] sm:$0xf]
        %v290 = vld [vmem:[#allocation5 + $0x38] sm:$0xf]
        %v291 = vld [vmem:[#allocation5 + $0x3c] sm:$0xf]
        %v292 = vld [vmem:[%s2] sm:$0x1]
        %v294 = vperm.slane %v292, 0
        %v312 = vunpack.c.l.b16 %v276
        %v313 = vunpack.c.l.b16 %v277
        %v314 = vunpack.c.l.b16 %v278
        %v315 = vunpack.c.l.b16 %v279
        %v316 = vunpack.c.l.b16 %v280
        %v317 = vunpack.c.l.b16 %v281
        %v318 = vunpack.c.l.b16 %v282
        %v319 = vunpack.c.l.b16 %v283
        %v320 = vunpack.c.l.b16 %v284
        %v321 = vunpack.c.l.b16 %v285
        %v322 = vunpack.c.l.b16 %v286
        %v323 = vunpack.c.l.b16 %v287
        %v324 = vunpack.c.l.b16 %v288
        %v325 = vunpack.c.l.b16 %v289
        %v326 = vunpack.c.l.b16 %v290
        %v327 = vunpack.c.l.b16 %v291
        %v328 = vpack.c.b16 %v313, %v312
        %v329 = vpack.c.b16 %v315, %v314
        %v330 = vpack.c.b16 %v317, %v316
        %v331 = vpack.c.b16 %v319, %v318
        %v332 = vpack.c.b16 %v321, %v320
        %v333 = vpack.c.b16 %v323, %v322
        %v334 = vpack.c.b16 %v325, %v324
        %v335 = vpack.c.b16 %v327, %v326
        %344 = vmatpush.bf16.msra.mxu0 %v335
        %345 = vmatpush.bf16.msra.mxu0 %v334
        %346 = vmatpush.bf16.msra.mxu0 %v333
        %347 = vmatpush.bf16.msra.mxu0 %v332
        %348 = vmatpush.bf16.msra.mxu0 %v331
        %349 = vmatpush.bf16.msra.mxu0 %v330
        %350 = vmatpush.bf16.msra.mxu0 %v329
        %351 = vmatpush.bf16.msra.mxu0 %v328
        %352 = vmatmul.bf16.gmra.mxu0 %v275
        %v353 = vpop.f32.mrf.mxu0
        %v354 = vadd.f32 %v294, %v353
        %v355 = vpop.f32.mrf.mxu0
        %356 = vdwg.mxu0
        %v357 = vmax.f32 %v354, 0.0
        %v358 = vpack.c.bf16 %v357, %v357
        %v359 = vld [vmem:[#allocation7] sm:$0xf]
        %v360 = vld [vmem:[#allocation7 + $0x4] sm:$0xf]
        %v361 = vld [vmem:[#allocation7 + $0x8] sm:$0xf]
        %v362 = vld [vmem:[#allocation7 + $0xc] sm:$0xf]
        %v363 = vld [vmem:[#allocation7 + $0x10] sm:$0xf]
        %v364 = vld [vmem:[#allocation7 + $0x14] sm:$0xf]
        %v365 = vld [vmem:[#allocation7 + $0x18] sm:$0xf]
        %v366 = vld [vmem:[#allocation7 + $0x1c] sm:$0xf]
        %v367 = vld [vmem:[#allocation7 + $0x20] sm:$0xf]
        %v368 = vld [vmem:[#allocation7 + $0x24] sm:$0xf]
        %v369 = vld [vmem:[#allocation7 + $0x28] sm:$0xf]
        %v370 = vld [vmem:[#allocation7 + $0x2c] sm:$0xf]
        %v371 = vld [vmem:[#allocation7 + $0x30] sm:$0xf]
        %v372 = vld [vmem:[#allocation7 + $0x34] sm:$0xf]
        %v373 = vld [vmem:[#allocation7 + $0x38] sm:$0xf]
        %v374 = vld [vmem:[#allocation7 + $0x3c] sm:$0xf]
        %v391 = vunpack.c.l.b16 %v359
        %v392 = vunpack.c.l.b16 %v360
        %v393 = vunpack.c.l.b16 %v361
        %v394 = vunpack.c.l.b16 %v362
        %v395 = vunpack.c.l.b16 %v363
        %v396 = vunpack.c.l.b16 %v364
        %v397 = vunpack.c.l.b16 %v365
        %v398 = vunpack.c.l.b16 %v366
        %v399 = vunpack.c.l.b16 %v367
        %v400 = vunpack.c.l.b16 %v368
        %v401 = vunpack.c.l.b16 %v369
        %v402 = vunpack.c.l.b16 %v370
        %v403 = vunpack.c.l.b16 %v371
        %v404 = vunpack.c.l.b16 %v372
        %v405 = vunpack.c.l.b16 %v373
        %v406 = vunpack.c.l.b16 %v374
        %v407 = vpack.c.b16 %v392, %v391
        %v408 = vpack.c.b16 %v394, %v393
        %v409 = vpack.c.b16 %v396, %v395
        %v410 = vpack.c.b16 %v398, %v397
        %v411 = vpack.c.b16 %v400, %v399
        %v412 = vpack.c.b16 %v402, %v401
        %v413 = vpack.c.b16 %v404, %v403
        %v414 = vpack.c.b16 %v406, %v405
        %423 = vmatpush.bf16.msra.mxu0 %v414
        %424 = vmatpush.bf16.msra.mxu0 %v413
        %425 = vmatpush.bf16.msra.mxu0 %v412
        %426 = vmatpush.bf16.msra.mxu0 %v411
        %427 = vmatpush.bf16.msra.mxu0 %v410
        %428 = vmatpush.bf16.msra.mxu0 %v409
        %429 = vmatpush.bf16.msra.mxu0 %v408
        %430 = vmatpush.bf16.msra.mxu0 %v407
        %431 = vmatmul.bf16.gmra.mxu0 %v358
        %v432 = vpop.f32.mrf.mxu0
        %v433 = vadd.f32 0.0, %v432
        %v434 = vpop.f32.mrf.mxu0
        %435 = vdwg.mxu0
        %436 = vst [vmem:[%s274] sm:$0xff] %v433
        %v437 = vld [vmem:[%s274] sm:$0xff]
        %v438 = vld [vmem:[%s4] sm:$0x1]
        %v440 = vperm.slane %v438, 0
        %v442 = vadd.f32 %v437, %v440
        %443 = vst [vmem:[%s274] sm:$0xff] %v442
        %s444 = sand.u32 %s141, 1
        %s445 = scalar_lea.sflag [#allocation4], %s444
        %s446 = sand.u32 %s141, 1
        %s447 = smul.addr %s446, 8
        %s448 = scalar_lea.vmem [#allocation8], %s447
        // Predicated region
        $region53: #{tpu_custom_call.1} parent=39 // pred_check
          %p449 = pneg %p151
        $region54: #{tpu_custom_call.1} parent=39 // pred_check_branch
          %451 = sbr.rel (%p449) target = $region56
        $region55: #{tpu_custom_call.1} parent=39 // pred_region
          %453 = vsyncadd %s445, 0
          %s454 = smul.addr %s23, 8
          %s455 = scalar_lea.hbm %s5, %s454
          %s457 = sshll.u32 %s448, 4
          %s458 = int_to_ptr.vmem [resolvable:$true] %s457
          %s459 = sshll.u32 %s455, 4
          %s460 = int_to_ptr.hbm [resolvable:$true] %s459
          %462 = dma.vmem_to_hbm [thread:$0]  %s458, 128, %s460, %s445
        $region56: #{tpu_custom_call.1} parent=39 // pred_fallthru
          _
      $region40: #{tpu_custom_call.1} parent=5 // pred_fallthru
        _
      %p463 = scmp.le.s32.totalorder 2, %s18
      // Predicated region
      $region57: #{tpu_custom_call.1} parent=5 // pred_check
        %p464 = pneg %p463
      $region58: #{tpu_custom_call.1} parent=5 // pred_check_branch
        %466 = sbr.rel (%p464) target = $region60
      $region59: #{tpu_custom_call.1} parent=5 // pred_region
        %s467 = ssub.s32 %s18, 2
        // Predicated region
        $region61: #{tpu_custom_call.1} parent=59 // pred_check
          %p468 = pneg %p157
        $region62: #{tpu_custom_call.1} parent=59 // pred_check_branch
          %470 = sbr.rel (%p468) target = $region64
        $region63: #{tpu_custom_call.1} parent=59 // pred_region
          %s471 = sand.u32 %s142, 1
          %s472 = scalar_lea.sflag [#allocation4], %s471
          %s473 = sand.u32 %s142, 1
          %s474 = smul.addr %s473, 8
          %s475 = scalar_lea.vmem [#allocation8], %s474
          %477 = dma.done %s472, 128
        $region64: #{tpu_custom_call.1} parent=59 // pred_fallthru
          _
      $region60: #{tpu_custom_call.1} parent=5 // pred_fallthru
        _
    $region6: #{tpu_custom_call.1} parent=1 // loop_footer
      %s22 = sadd.s32 1, %s18
    $region7: #{tpu_custom_call.1} parent=1 // loop_footer_branch
      %17 = sbr.rel target = $region3
    $region8: #{tpu_custom_call.1} parent=1 // loop_exit
      _
    %478 = vsyncpa [#allocation3], 1
    %s479 = scalar_lea.sflag [#allocation3], 1
    %480 = vsyncpa %s479, 1
    %481 = vsyncpa [#allocation6], 1
    %482 = vsyncpa [#allocation4], 1
    %s483 = scalar_lea.sflag [#allocation4], 1
    %484 = vsyncpa %s483, 1

</llo_original>
